<compile_context>
chip_gen: v6e
topology: v6e:2x2x1
jax: 0.10.0
libtpu: 0.0.40
codegen_flags: <defaults>
</compile_context>

<pallas_src>
import functools
import math

import numpy as np

import jax
import jax.numpy as jnp
from jax import lax
from jax.experimental import pallas as pl
from jax.experimental.pallas import tpu as pltpu

# ----------------------------- constants ------------------------------------
IN_FEATURES = 28 * 28          # 784
N1, N2, N3 = 20, 15, 10        # layer widths (N3 = classes)
N_CLASSES = N3
LANE = 128                     # lane-dense padded width

KAF_D = 20
KAF_BOUNDARY = 4.0
_KAF_STEP = 2.0 * KAF_BOUNDARY / (KAF_D - 1)
KAF_DICT = tuple(-KAF_BOUNDARY + d * _KAF_STEP for d in range(KAF_D))
KAF_GAMMA = 0.5 / (2.0 * _KAF_STEP) ** 2
SQRT_GAMMA = math.sqrt(KAF_GAMMA)

# Lane-packing geometry.
G1 = LANE // N1                        # 6 replica groups of the 20 channels
G2 = LANE // N2                        # 8 replica groups of the 15 channels
T1 = -(-KAF_D // G1)                   # 4 dict iterations for layer 1
T2 = -(-KAF_D // G2)                   # 3 dict iterations for layer 2


# ------------------------------- kernels ------------------------------------
def _kaf_packed(h, c, a):
    """Lane-packed Gaussian KAF.

    h: (TB, LANE) packed pre-activations (channel n replicated per group).
    c: (T, LANE)  sqrt(gamma)*dict constant assigned to each lane, per iter.
    a: (T, LANE)  packed alphas (zero where no dict point is assigned).
    Result lane (g, n) holds the partial KAF sum over group g's dict subset;
    the cross-group sum is folded into the next (row-replicated) matmul.
    """
    hs = h * SQRT_GAMMA                        # pre-scale once per layer
    acc = jnp.zeros_like(h)
    for t in range(c.shape[0]):                # static unroll (4 or 3 iters)
        diff = hs - c[t:t + 1, :]
        acc = acc + jnp.exp(-(diff * diff)) * a[t:t + 1, :]   # EUP exp
    return acc


def ff_kaf_fwd_kernel(x_ref,
                      w1_ref, b1_ref, c1_ref, a1_ref,
                      w2_ref, b2_ref, c2_ref, a2_ref,
                      w3_ref, b3_ref,
                      logits_ref, lse_ref,
                      m_ref, s_ref,
                      *, real_rows, mask_rows):
    i = pl.program_id(0)
    tb = x_ref.shape[0]

    h = jnp.dot(x_ref[...], w1_ref[...],
                preferred_element_type=jnp.float32) + b1_ref[...]
    h = _kaf_packed(h, c1_ref[...], a1_ref[...])
    h = jnp.dot(h, w2_ref[...],
                preferred_element_type=jnp.float32) + b2_ref[...]
    h = _kaf_packed(h, c2_ref[...], a2_ref[...])
    logits = jnp.dot(h, w3_ref[...],
                     preferred_element_type=jnp.float32) + b3_ref[...]

    # Stream the raw logit tile out (lane-dense, unmasked full-block store).
    logits_ref[...] = logits

    # Online per-class (dim=0) max / sum-exp across batch tiles.
    if mask_rows:  # compile-time: only when the batch was padded to the tile
        rows = lax.broadcasted_iota(jnp.int32, logits.shape, 0) + i * tb
        stats = jnp.where(rows < real_rows, logits, -jnp.inf)
    else:
        stats = logits

    @pl.when(i == 0)
    def _():
        m_ref[...] = jnp.full_like(m_ref, -jnp.inf)
        s_ref[...] = jnp.zeros_like(s_ref)

    m_old = m_ref[...]
    m_new = jnp.maximum(m_old, jnp.max(stats, axis=0, keepdims=True))
    s_ref[...] = (s_ref[...] * jnp.exp(m_old - m_new)
                  + jnp.sum(jnp.exp(stats - m_new), axis=0, keepdims=True))
    m_ref[...] = m_new

    @pl.when(i == pl.num_programs(0) - 1)
    def _():
        lse_ref[...] = m_ref[...] + jnp.log(s_ref[...])


def finalize_kernel(logits_ref, lse_ref, o_ref):
    """Second pass: log_softmax(dim=0) = logits - lse (per-class)."""
    o_ref[...] = logits_ref[...] - lse_ref[...]


# ----------------------------- wrapper / call -------------------------------
def _round_up(x, m):
    return (x + m - 1) // m * m


def _pick_batch_tile(batch, cap=1024):
    """Batch tile: multiple of 8, capped at 1024 (amortizes per-step overhead;
    x tile at 1024 rows is ~3.2 MB, safe under v5e/v6e/v7x scoped VMEM)."""
    return min(cap, _round_up(batch, 8))


def build_ff_kaf_forward(batch):
    tb = _pick_batch_tile(batch)
    padded_batch = _round_up(batch, tb)
    nbt = padded_batch // tb
    mask_rows = padded_batch != batch

    const = lambda i: (0, 0)   # invariant operands: DMA once, stay resident

    fwd = pl.pallas_call(
        functools.partial(ff_kaf_fwd_kernel,
                          real_rows=batch, mask_rows=mask_rows),
        grid_spec=pltpu.PrefetchScalarGridSpec(
            num_scalar_prefetch=0,
            grid=(nbt,),
            in_specs=[
                pl.BlockSpec((tb, IN_FEATURES), lambda i: (i, 0)),   # x tile
                pl.BlockSpec((IN_FEATURES, LANE), const),            # W1 packed
                pl.BlockSpec((1, LANE), const),                      # b1 packed
                pl.BlockSpec((T1, LANE), const),                     # dict c1
                pl.BlockSpec((T1, LANE), const),                     # alpha1
                pl.BlockSpec((LANE, LANE), const),                   # W2 packed
                pl.BlockSpec((1, LANE), const),                      # b2 packed
                pl.BlockSpec((T2, LANE), const),                     # dict c2
                pl.BlockSpec((T2, LANE), const),                     # alpha2
                pl.BlockSpec((LANE, LANE), const),                   # W3 packed
                pl.BlockSpec((1, LANE), const),                      # b3 packed
            ],
            out_specs=(
                pl.BlockSpec((tb, LANE), lambda i: (i, 0)),          # logits
                pl.BlockSpec((1, LANE), const),                      # lse
            ),
            scratch_shapes=[pltpu.VMEM((1, LANE), jnp.float32),      # run. max
                            pltpu.VMEM((1, LANE), jnp.float32)]),    # run. sum
        out_shape=(jax.ShapeDtypeStruct((padded_batch, LANE), jnp.float32),
                   jax.ShapeDtypeStruct((1, LANE), jnp.float32)),
        compiler_params=pltpu.CompilerParams(
            # Online dim=0 softmax stats are carried across steps -> sequential.
            dimension_semantics=("arbitrary",)),
    )

    finalize = pl.pallas_call(
        finalize_kernel,
        grid=(nbt,),
        in_specs=[pl.BlockSpec((tb, LANE), lambda i: (i, 0)),
                  pl.BlockSpec((1, LANE), lambda i: (0, 0))],
        out_specs=pl.BlockSpec((tb, LANE), lambda i: (i, 0)),
        out_shape=jax.ShapeDtypeStruct((padded_batch, LANE), jnp.float32),
        compiler_params=pltpu.CompilerParams(
            dimension_semantics=("parallel",)),
    )

    @jax.jit
    def forward(x, packed_params):
        x2d = x.reshape(-1, IN_FEATURES).astype(jnp.float32)
        if mask_rows:
            x2d = jnp.pad(x2d, ((0, padded_batch - batch), (0, 0)))
        logits, lse = fwd(x2d, *packed_params)
        out = finalize(logits, lse)
        return out[:batch, :N_CLASSES]

    return forward


# --------------------------- params: init & prep ----------------------------
def init_ff_kaf_params(key):
    """Deterministic init matching nn.Linear defaults; KAF alphas ~ N(0, 0.3)."""
    dims = [(IN_FEATURES, N1), (N1, N2), (N2, N3)]
    ws, bs = [], []
    k = key
    for fan_in, fan_out in dims:
        k, kw, kb = jax.random.split(k, 3)
        bound = 1.0 / math.sqrt(fan_in)
        ws.append(jax.random.uniform(kw, (fan_out, fan_in), jnp.float32,
                                     -bound, bound))
        bs.append(jax.random.uniform(kb, (fan_out,), jnp.float32, -bound, bound))
    k, ka1, ka2 = jax.random.split(k, 3)
    a1 = 0.3 * jax.random.normal(ka1, (N1, KAF_D), jnp.float32)
    a2 = 0.3 * jax.random.normal(ka2, (N2, KAF_D), jnp.float32)
    return (ws[0], bs[0], a1, ws[1], bs[1], a2, ws[2], bs[2])


def prepare_params(params):
    """One-time layout prep (hoisted out of the per-call path).

    Builds the lane-packed layouts:
      * W1 columns / b1 replicated G1x so layer-1 activations arrive packed.
      * alpha1 / dict constants repacked as (T1, LANE): iteration t, group g
        handles dict point d = t*G1 + g (zero alpha where d >= D).
      * W2 rows replicated G1x (folds KAF1's group reduction into the MXU
        contraction) and columns / b2 replicated G2x (packs layer 2).
      * alpha2 / dict constants repacked as (T2, LANE) analogously.
      * W3 rows replicated G2x (folds KAF2's group reduction); 10 real logit
        columns, rest zero.
    Exactness: unused lanes / dict slots carry zero weights & alphas, so they
    contribute nothing downstream; padded logit columns are sliced off.
    """
    w1, b1, a1, w2, b2, a2, w3, b3 = [np.asarray(p, np.float32) for p in params]
    dict_np = np.asarray(KAF_DICT, np.float32)

    w1p = np.zeros((IN_FEATURES, LANE), np.float32)
    b1p = np.zeros((1, LANE), np.float32)
    a1p = np.zeros((T1, LANE), np.float32)
    c1p = np.zeros((T1, LANE), np.float32)
    for g in range(G1):
        sl = slice(g * N1, (g + 1) * N1)
        w1p[:, sl] = w1.T
        b1p[0, sl] = b1
        for t in range(T1):
            d = t * G1 + g
            if d < KAF_D:
                a1p[t, sl] = a1[:, d]
                c1p[t, sl] = SQRT_GAMMA * dict_np[d]

    w2p = np.zeros((LANE, LANE), np.float32)
    b2p = np.zeros((1, LANE), np.float32)
    a2p = np.zeros((T2, LANE), np.float32)
    c2p = np.zeros((T2, LANE), np.float32)
    for g2 in range(G2):
        sl2 = slice(g2 * N2, (g2 + 1) * N2)
        b2p[0, sl2] = b2
        for g1 in range(G1):
            w2p[g1 * N1:(g1 + 1) * N1, sl2] = w2.T
        for t in range(T2):
            d = t * G2 + g2
            if d < KAF_D:
                a2p[t, sl2] = a2[:, d]
                c2p[t, sl2] = SQRT_GAMMA * dict_np[d]

    w3p = np.zeros((LANE, LANE), np.float32)
    b3p = np.zeros((1, LANE), np.float32)
    b3p[0, :N3] = b3
    for g2 in range(G2):
        w3p[g2 * N2:(g2 + 1) * N2, :N3] = w3.T

    return tuple(jnp.asarray(a) for a in
                 (w1p, b1p, c1p, a1p, w2p, b2p, c2p, a2p, w3p, b3p))


# ------------------------------ pure-JAX ref ---------------------------------
def _kaf_ref(h, alpha):
    dict_arr = jnp.asarray(KAF_DICT, jnp.float32)                    # (D,)
    k = jnp.exp(-KAF_GAMMA * (h[..., None] - dict_arr) ** 2)         # (B,N,D)
    return jnp.sum(k * alpha[None, :, :], axis=-1)


def ff_kaf_reference(x, params):
    w1, b1, a1, w2, b2, a2, w3, b3 = params
    h = x.reshape(-1, IN_FEATURES).astype(jnp.float32)
    h = _kaf_ref(h @ w1.T + b1, a1)
    h = _kaf_ref(h @ w2.T + b2, a2)
    logits = h @ w3.T + b3
    return jax.nn.log_softmax(logits, axis=0)


# ---------------------------------- main -------------------------------------
if __name__ == "__main__":
    key = jax.random.PRNGKey(0)
    key, kx = jax.random.split(key)

    params = init_ff_kaf_params(key)
    packed_params = prepare_params(params)      # one-time, outside call path

    B = 8
    x = jax.random.normal(kx, (B, 1, 28, 28), dtype=jnp.float32)

    forward = build_ff_kaf_forward(B)
    out = jax.block_until_ready(forward(x, packed_params))

    ref = ff_kaf_reference(x, params)
    assert out.shape == (B, N_CLASSES)
    err = float(jnp.max(jnp.abs(out - ref)))
    assert jnp.allclose(out, ref, atol=1e-3, rtol=1e-3), f"mismatch vs ref: {err}"

    print("KERNEL_OK")
</pallas_src>

<mosaic_0001>
module attributes {stable_mosaic.version = 11 : i64} {
  func.func @finalize_kernel(%arg0: i32, %arg1: memref<8x128xf32, #tpu.memory_space<vmem>>, %arg2: memref<1x128xf32, #tpu.memory_space<vmem>>, %arg3: memref<8x128xf32, #tpu.memory_space<vmem>>) attributes {dimension_semantics = [#tpu.dimension_semantics<parallel>], iteration_bounds = array<i64: 1>, scalar_prefetch = 0 : i64, scratch_operands = 0 : i64, tpu.core_type = #tpu.core_type<tc>, window_params = [{transform_indices = @transform_0, window_bounds = array<i64: 8, 128>}, {pipeline_mode = #tpu.pipeline_mode<synchronous>, transform_indices = @transform_1, window_bounds = array<i64: 1, 128>}, {transform_indices = @transform_2, window_bounds = array<i64: 8, 128>}]} {
    %c0 = arith.constant 0 : index
    %c0_0 = arith.constant 0 : index
    %0 = vector.load %arg1[%c0, %c0_0] : memref<8x128xf32, #tpu.memory_space<vmem>>, vector<8x128xf32>
    %c0_1 = arith.constant 0 : index
    %c0_2 = arith.constant 0 : index
    %1 = vector.load %arg2[%c0_1, %c0_2] : memref<1x128xf32, #tpu.memory_space<vmem>>, vector<1x128xf32>
    %2 = vector.broadcast %1 : vector<1x128xf32> to vector<8x128xf32>
    %3 = arith.subf %0, %2 : vector<8x128xf32>
    %c0_3 = arith.constant 0 : index
    %c0_4 = arith.constant 0 : index
    %4 = vector.load %arg3[%c0_3, %c0_4] : memref<8x128xf32, #tpu.memory_space<vmem>>, vector<8x128xf32>
    tpu.vector_store %arg3[%c0_3, %c0_4], %3 {strides = array<i32>} : memref<8x128xf32, #tpu.memory_space<vmem>>, vector<8x128xf32>,
    return
  }
  func.func @transform_0(%arg0: i32) -> (i32, i32) {
    %c0_i32 = arith.constant 0 : i32
    %c0_i32_0 = arith.constant 0 : i32
    return %arg0, %c0_i32 : i32, i32
  }
  func.func @transform_1(%arg0: i32) -> (i32, i32) {
    %c0_i32 = arith.constant 0 : i32
    %c0_i32_0 = arith.constant 0 : i32
    %c0_i32_1 = arith.constant 0 : i32
    return %c0_i32, %c0_i32_0 : i32, i32
  }
  func.func @transform_2(%arg0: i32) -> (i32, i32) {
    %c0_i32 = arith.constant 0 : i32
    %c0_i32_0 = arith.constant 0 : i32
    return %arg0, %c0_i32 : i32, i32
  }
}

module attributes {stable_mosaic.version = 11 : i64} {
  func.func @ff_kaf_fwd_kernel(%arg0: i32, %arg1: memref<8x784xf32, #tpu.memory_space<vmem>>, %arg2: memref<784x128xf32, #tpu.memory_space<vmem>>, %arg3: memref<1x128xf32, #tpu.memory_space<vmem>>, %arg4: memref<4x128xf32, #tpu.memory_space<vmem>>, %arg5: memref<4x128xf32, #tpu.memory_space<vmem>>, %arg6: memref<128x128xf32, #tpu.memory_space<vmem>>, %arg7: memref<1x128xf32, #tpu.memory_space<vmem>>, %arg8: memref<3x128xf32, #tpu.memory_space<vmem>>, %arg9: memref<3x128xf32, #tpu.memory_space<vmem>>, %arg10: memref<128x128xf32, #tpu.memory_space<vmem>>, %arg11: memref<1x128xf32, #tpu.memory_space<vmem>>, %arg12: memref<8x128xf32, #tpu.memory_space<vmem>>, %arg13: memref<1x128xf32, #tpu.memory_space<vmem>>, %arg14: memref<1x128xf32, #tpu.memory_space<vmem>>, %arg15: memref<1x128xf32, #tpu.memory_space<vmem>>) attributes {dimension_semantics = [#tpu.dimension_semantics<arbitrary>], iteration_bounds = array<i64: 1>, scalar_prefetch = 0 : i64, scratch_operands = 2 : i64, tpu.core_type = #tpu.core_type<tc>, window_params = [{transform_indices = @transform_0, window_bounds = array<i64: 8, 784>}, {pipeline_mode = #tpu.pipeline_mode<synchronous>, transform_indices = @transform_1, window_bounds = array<i64: 784, 128>}, {pipeline_mode = #tpu.pipeline_mode<synchronous>, transform_indices = @transform_2, window_bounds = array<i64: 1, 128>}, {pipeline_mode = #tpu.pipeline_mode<synchronous>, transform_indices = @transform_3, window_bounds = array<i64: 4, 128>}, {pipeline_mode = #tpu.pipeline_mode<synchronous>, transform_indices = @transform_4, window_bounds = array<i64: 4, 128>}, {pipeline_mode = #tpu.pipeline_mode<synchronous>, transform_indices = @transform_5, window_bounds = array<i64: 128, 128>}, {pipeline_mode = #tpu.pipeline_mode<synchronous>, transform_indices = @transform_6, window_bounds = array<i64: 1, 128>}, {pipeline_mode = #tpu.pipeline_mode<synchronous>, transform_indices = @transform_7, window_bounds = array<i64: 3, 128>}, {pipeline_mode = #tpu.pipeline_mode<synchronous>, transform_indices = @transform_8, window_bounds = array<i64: 3, 128>}, {pipeline_mode = #tpu.pipeline_mode<synchronous>, transform_indices = @transform_9, window_bounds = array<i64: 128, 128>}, {pipeline_mode = #tpu.pipeline_mode<synchronous>, transform_indices = @transform_10, window_bounds = array<i64: 1, 128>}, {transform_indices = @transform_11, window_bounds = array<i64: 8, 128>}, {pipeline_mode = #tpu.pipeline_mode<synchronous>, transform_indices = @transform_12, window_bounds = array<i64: 1, 128>}]} {
    %c0 = arith.constant 0 : index
    %c0_0 = arith.constant 0 : index
    %0 = vector.load %arg1[%c0, %c0_0] : memref<8x784xf32, #tpu.memory_space<vmem>>, vector<8x784xf32>
    %c0_1 = arith.constant 0 : index
    %c0_2 = arith.constant 0 : index
    %1 = vector.load %arg2[%c0_1, %c0_2] : memref<784x128xf32, #tpu.memory_space<vmem>>, vector<784x128xf32>
    %cst = arith.constant dense<0.000000e+00> : vector<8x128xf32>
    %2 = tpu.matmul %0, %1, %cst {dimension_numbers = #tpu.dot_dimension_numbers<[1], [0], [0], [1], [0, 0, 1, 1], [], []>} : vector<8x784xf32>, vector<784x128xf32>, vector<8x128xf32> -> vector<8x128xf32>
    %c0_3 = arith.constant 0 : index
    %c0_4 = arith.constant 0 : index
    %3 = vector.load %arg3[%c0_3, %c0_4] : memref<1x128xf32, #tpu.memory_space<vmem>>, vector<1x128xf32>
    %4 = vector.broadcast %3 : vector<1x128xf32> to vector<8x128xf32>
    %5 = arith.addf %2, %4 : vector<8x128xf32>
    %c0_5 = arith.constant 0 : index
    %c0_6 = arith.constant 0 : index
    %6 = vector.load %arg4[%c0_5, %c0_6] : memref<4x128xf32, #tpu.memory_space<vmem>>, vector<4x128xf32>
    %c0_7 = arith.constant 0 : index
    %c0_8 = arith.constant 0 : index
    %7 = vector.load %arg5[%c0_7, %c0_8] : memref<4x128xf32, #tpu.memory_space<vmem>>, vector<4x128xf32>
    %cst_9 = arith.constant 0.839689314 : f32
    %8 = vector.broadcast %cst_9 : f32 to vector<8x128xf32>
    %9 = arith.mulf %5, %8 : vector<8x128xf32>
    %cst_10 = arith.constant 0.000000e+00 : f32
    %10 = vector.broadcast %cst_10 : f32 to vector<8x128xf32>
    %11 = vector.extract_strided_slice %6 {offsets = [0, 0], sizes = [1, 128], strides = [1, 1]} : vector<4x128xf32> to vector<1x128xf32>
    %12 = vector.broadcast %11 : vector<1x128xf32> to vector<8x128xf32>
    %13 = arith.subf %9, %12 : vector<8x128xf32>
    %14 = arith.mulf %13, %13 : vector<8x128xf32>
    %cst_11 = arith.constant 0.000000e+00 : f32
    %15 = vector.broadcast %cst_11 : f32 to vector<8x128xf32>
    %16 = arith.subf %15, %14 : vector<8x128xf32>
    %17 = math.exp %16 : vector<8x128xf32>
    %18 = vector.extract_strided_slice %7 {offsets = [0, 0], sizes = [1, 128], strides = [1, 1]} : vector<4x128xf32> to vector<1x128xf32>
    %19 = vector.broadcast %18 : vector<1x128xf32> to vector<8x128xf32>
    %20 = arith.mulf %17, %19 : vector<8x128xf32>
    %21 = arith.addf %10, %20 : vector<8x128xf32>
    %22 = vector.extract_strided_slice %6 {offsets = [1, 0], sizes = [1, 128], strides = [1, 1]} : vector<4x128xf32> to vector<1x128xf32>
    %23 = vector.broadcast %22 : vector<1x128xf32> to vector<8x128xf32>
    %24 = arith.subf %9, %23 : vector<8x128xf32>
    %25 = arith.mulf %24, %24 : vector<8x128xf32>
    %cst_12 = arith.constant 0.000000e+00 : f32
    %26 = vector.broadcast %cst_12 : f32 to vector<8x128xf32>
    %27 = arith.subf %26, %25 : vector<8x128xf32>
    %28 = math.exp %27 : vector<8x128xf32>
    %29 = vector.extract_strided_slice %7 {offsets = [1, 0], sizes = [1, 128], strides = [1, 1]} : vector<4x128xf32> to vector<1x128xf32>
    %30 = vector.broadcast %29 : vector<1x128xf32> to vector<8x128xf32>
    %31 = arith.mulf %28, %30 : vector<8x128xf32>
    %32 = arith.addf %21, %31 : vector<8x128xf32>
    %33 = vector.extract_strided_slice %6 {offsets = [2, 0], sizes = [1, 128], strides = [1, 1]} : vector<4x128xf32> to vector<1x128xf32>
    %34 = vector.broadcast %33 : vector<1x128xf32> to vector<8x128xf32>
    %35 = arith.subf %9, %34 : vector<8x128xf32>
    %36 = arith.mulf %35, %35 : vector<8x128xf32>
    %cst_13 = arith.constant 0.000000e+00 : f32
    %37 = vector.broadcast %cst_13 : f32 to vector<8x128xf32>
    %38 = arith.subf %37, %36 : vector<8x128xf32>
    %39 = math.exp %38 : vector<8x128xf32>
    %40 = vector.extract_strided_slice %7 {offsets = [2, 0], sizes = [1, 128], strides = [1, 1]} : vector<4x128xf32> to vector<1x128xf32>
    %41 = vector.broadcast %40 : vector<1x128xf32> to vector<8x128xf32>
    %42 = arith.mulf %39, %41 : vector<8x128xf32>
    %43 = arith.addf %32, %42 : vector<8x128xf32>
    %44 = vector.extract_strided_slice %6 {offsets = [3, 0], sizes = [1, 128], strides = [1, 1]} : vector<4x128xf32> to vector<1x128xf32>
    %45 = vector.broadcast %44 : vector<1x128xf32> to vector<8x128xf32>
    %46 = arith.subf %9, %45 : vector<8x128xf32>
    %47 = arith.mulf %46, %46 : vector<8x128xf32>
    %cst_14 = arith.constant 0.000000e+00 : f32
    %48 = vector.broadcast %cst_14 : f32 to vector<8x128xf32>
    %49 = arith.subf %48, %47 : vector<8x128xf32>
    %50 = math.exp %49 : vector<8x128xf32>
    %51 = vector.extract_strided_slice %7 {offsets = [3, 0], sizes = [1, 128], strides = [1, 1]} : vector<4x128xf32> to vector<1x128xf32>
    %52 = vector.broadcast %51 : vector<1x128xf32> to vector<8x128xf32>
    %53 = arith.mulf %50, %52 : vector<8x128xf32>
    %54 = arith.addf %43, %53 : vector<8x128xf32>
    %c0_15 = arith.constant 0 : index
    %c0_16 = arith.constant 0 : index
    %55 = vector.load %arg6[%c0_15, %c0_16] : memref<128x128xf32, #tpu.memory_space<vmem>>, vector<128x128xf32>
    %cst_17 = arith.constant dense<0.000000e+00> : vector<8x128xf32>
    %56 = tpu.matmul %54, %55, %cst_17 {dimension_numbers = #tpu.dot_dimension_numbers<[1], [0], [0], [1], [0, 0, 1, 1], [], []>} : vector<8x128xf32>, vector<128x128xf32>, vector<8x128xf32> -> vector<8x128xf32>
    %c0_18 = arith.constant 0 : index
    %c0_19 = arith.constant 0 : index
    %57 = vector.load %arg7[%c0_18, %c0_19] : memref<1x128xf32, #tpu.memory_space<vmem>>, vector<1x128xf32>
    %58 = vector.broadcast %57 : vector<1x128xf32> to vector<8x128xf32>
    %59 = arith.addf %56, %58 : vector<8x128xf32>
    %c0_20 = arith.constant 0 : index
    %c0_21 = arith.constant 0 : index
    %60 = vector.load %arg8[%c0_20, %c0_21] : memref<3x128xf32, #tpu.memory_space<vmem>>, vector<3x128xf32>
    %c0_22 = arith.constant 0 : index
    %c0_23 = arith.constant 0 : index
    %61 = vector.load %arg9[%c0_22, %c0_23] : memref<3x128xf32, #tpu.memory_space<vmem>>, vector<3x128xf32>
    %cst_24 = arith.constant 0.839689314 : f32
    %62 = vector.broadcast %cst_24 : f32 to vector<8x128xf32>
    %63 = arith.mulf %59, %62 : vector<8x128xf32>
    %cst_25 = arith.constant 0.000000e+00 : f32
    %64 = vector.broadcast %cst_25 : f32 to vector<8x128xf32>
    %65 = vector.extract_strided_slice %60 {offsets = [0, 0], sizes = [1, 128], strides = [1, 1]} : vector<3x128xf32> to vector<1x128xf32>
    %66 = vector.broadcast %65 : vector<1x128xf32> to vector<8x128xf32>
    %67 = arith.subf %63, %66 : vector<8x128xf32>
    %68 = arith.mulf %67, %67 : vector<8x128xf32>
    %cst_26 = arith.constant 0.000000e+00 : f32
    %69 = vector.broadcast %cst_26 : f32 to vector<8x128xf32>
    %70 = arith.subf %69, %68 : vector<8x128xf32>
    %71 = math.exp %70 : vector<8x128xf32>
    %72 = vector.extract_strided_slice %61 {offsets = [0, 0], sizes = [1, 128], strides = [1, 1]} : vector<3x128xf32> to vector<1x128xf32>
    %73 = vector.broadcast %72 : vector<1x128xf32> to vector<8x128xf32>
    %74 = arith.mulf %71, %73 : vector<8x128xf32>
    %75 = arith.addf %64, %74 : vector<8x128xf32>
    %76 = vector.extract_strided_slice %60 {offsets = [1, 0], sizes = [1, 128], strides = [1, 1]} : vector<3x128xf32> to vector<1x128xf32>
    %77 = vector.broadcast %76 : vector<1x128xf32> to vector<8x128xf32>
    %78 = arith.subf %63, %77 : vector<8x128xf32>
    %79 = arith.mulf %78, %78 : vector<8x128xf32>
    %cst_27 = arith.constant 0.000000e+00 : f32
    %80 = vector.broadcast %cst_27 : f32 to vector<8x128xf32>
    %81 = arith.subf %80, %79 : vector<8x128xf32>
    %82 = math.exp %81 : vector<8x128xf32>
    %83 = vector.extract_strided_slice %61 {offsets = [1, 0], sizes = [1, 128], strides = [1, 1]} : vector<3x128xf32> to vector<1x128xf32>
    %84 = vector.broadcast %83 : vector<1x128xf32> to vector<8x128xf32>
    %85 = arith.mulf %82, %84 : vector<8x128xf32>
    %86 = arith.addf %75, %85 : vector<8x128xf32>
    %87 = vector.extract_strided_slice %60 {offsets = [2, 0], sizes = [1, 128], strides = [1, 1]} : vector<3x128xf32> to vector<1x128xf32>
    %88 = vector.broadcast %87 : vector<1x128xf32> to vector<8x128xf32>
    %89 = arith.subf %63, %88 : vector<8x128xf32>
    %90 = arith.mulf %89, %89 : vector<8x128xf32>
    %cst_28 = arith.constant 0.000000e+00 : f32
    %91 = vector.broadcast %cst_28 : f32 to vector<8x128xf32>
    %92 = arith.subf %91, %90 : vector<8x128xf32>
    %93 = math.exp %92 : vector<8x128xf32>
    %94 = vector.extract_strided_slice %61 {offsets = [2, 0], sizes = [1, 128], strides = [1, 1]} : vector<3x128xf32> to vector<1x128xf32>
    %95 = vector.broadcast %94 : vector<1x128xf32> to vector<8x128xf32>
    %96 = arith.mulf %93, %95 : vector<8x128xf32>
    %97 = arith.addf %86, %96 : vector<8x128xf32>
    %c0_29 = arith.constant 0 : index
    %c0_30 = arith.constant 0 : index
    %98 = vector.load %arg10[%c0_29, %c0_30] : memref<128x128xf32, #tpu.memory_space<vmem>>, vector<128x128xf32>
    %cst_31 = arith.constant dense<0.000000e+00> : vector<8x128xf32>
    %99 = tpu.matmul %97, %98, %cst_31 {dimension_numbers = #tpu.dot_dimension_numbers<[1], [0], [0], [1], [0, 0, 1, 1], [], []>} : vector<8x128xf32>, vector<128x128xf32>, vector<8x128xf32> -> vector<8x128xf32>
    %c0_32 = arith.constant 0 : index
    %c0_33 = arith.constant 0 : index
    %100 = vector.load %arg11[%c0_32, %c0_33] : memref<1x128xf32, #tpu.memory_space<vmem>>, vector<1x128xf32>
    %101 = vector.broadcast %100 : vector<1x128xf32> to vector<8x128xf32>
    %102 = arith.addf %99, %101 : vector<8x128xf32>
    %c0_34 = arith.constant 0 : index
    %c0_35 = arith.constant 0 : index
    %103 = vector.load %arg12[%c0_34, %c0_35] : memref<8x128xf32, #tpu.memory_space<vmem>>, vector<8x128xf32>
    tpu.vector_store %arg12[%c0_34, %c0_35], %102 {strides = array<i32>} : memref<8x128xf32, #tpu.memory_space<vmem>>, vector<8x128xf32>,
    %c0_i32 = arith.constant 0 : i32
    %104 = arith.cmpi eq, %arg0, %c0_i32 : i32
    %105 = arith.extui %104 : i1 to i32
    %c0_i32_36 = arith.constant 0 : i32
    %106 = arith.cmpi ne, %105, %c0_i32_36 : i32
    scf.if %106 {
      %cst_49 = arith.constant 0xFF800000 : f32
      %126 = vector.broadcast %cst_49 : f32 to vector<1x128xf32>
      %c0_50 = arith.constant 0 : index
      %c0_51 = arith.constant 0 : index
      %127 = vector.load %arg14[%c0_50, %c0_51] : memref<1x128xf32, #tpu.memory_space<vmem>>, vector<1x128xf32>
      tpu.vector_store %arg14[%c0_50, %c0_51], %126 {strides = array<i32>} : memref<1x128xf32, #tpu.memory_space<vmem>>, vector<1x128xf32>,
      %cst_52 = arith.constant 0.000000e+00 : f32
      %128 = vector.broadcast %cst_52 : f32 to vector<1x128xf32>
      %c0_53 = arith.constant 0 : index
      %c0_54 = arith.constant 0 : index
      %129 = vector.load %arg15[%c0_53, %c0_54] : memref<1x128xf32, #tpu.memory_space<vmem>>, vector<1x128xf32>
      tpu.vector_store %arg15[%c0_53, %c0_54], %128 {strides = array<i32>} : memref<1x128xf32, #tpu.memory_space<vmem>>, vector<1x128xf32>,
    } else {
    }
    %c0_37 = arith.constant 0 : index
    %c0_38 = arith.constant 0 : index
    %107 = vector.load %arg14[%c0_37, %c0_38] : memref<1x128xf32, #tpu.memory_space<vmem>>, vector<1x128xf32>
    %cst_39 = arith.constant dense<0xFF800000> : vector<128xf32>
    %108 = vector.multi_reduction <maximumf>, %102, %cst_39 [0] : vector<8x128xf32> to vector<128xf32>
    %109 = vector.shape_cast %108 : vector<128xf32> to vector<1x128xf32>
    %110 = arith.maximumf %107, %109 : vector<1x128xf32>
    %c0_40 = arith.constant 0 : index
    %c0_41 = arith.constant 0 : index
    %111 = vector.load %arg15[%c0_40, %c0_41] : memref<1x128xf32, #tpu.memory_space<vmem>>, vector<1x128xf32>
    %112 = arith.subf %107, %110 : vector<1x128xf32>
    %113 = math.exp %112 : vector<1x128xf32>
    %114 = arith.mulf %111, %113 : vector<1x128xf32>
    %115 = vector.broadcast %110 : vector<1x128xf32> to vector<8x128xf32>
    %116 = arith.subf %102, %115 : vector<8x128xf32>
    %117 = math.exp %116 : vector<8x128xf32>
    %cst_42 = arith.constant dense<0.000000e+00> : vector<128xf32>
    %118 = vector.multi_reduction <add>, %117, %cst_42 [0] : vector<8x128xf32> to vector<128xf32>
    %119 = vector.shape_cast %118 : vector<128xf32> to vector<1x128xf32>
    %120 = arith.addf %114, %119 : vector<1x128xf32>
    %c0_43 = arith.constant 0 : index
    %c0_44 = arith.constant 0 : index
    %121 = vector.load %arg15[%c0_43, %c0_44] : memref<1x128xf32, #tpu.memory_space<vmem>>, vector<1x128xf32>
    tpu.vector_store %arg15[%c0_43, %c0_44], %120 {strides = array<i32>} : memref<1x128xf32, #tpu.memory_space<vmem>>, vector<1x128xf32>,
    %c0_45 = arith.constant 0 : index
    %c0_46 = arith.constant 0 : index
    %122 = vector.load %arg14[%c0_45, %c0_46] : memref<1x128xf32, #tpu.memory_space<vmem>>, vector<1x128xf32>
    tpu.vector_store %arg14[%c0_45, %c0_46], %110 {strides = array<i32>} : memref<1x128xf32, #tpu.memory_space<vmem>>, vector<1x128xf32>,
    %c0_i32_47 = arith.constant 0 : i32
    %123 = arith.cmpi eq, %arg0, %c0_i32_47 : i32
    %124 = arith.extui %123 : i1 to i32
    %c0_i32_48 = arith.constant 0 : i32
    %125 = arith.cmpi ne, %124, %c0_i32_48 : i32
    scf.if %125 {
      %c0_49 = arith.constant 0 : index
      %c0_50 = arith.constant 0 : index
      %126 = vector.load %arg14[%c0_49, %c0_50] : memref<1x128xf32, #tpu.memory_space<vmem>>, vector<1x128xf32>
      %c0_51 = arith.constant 0 : index
      %c0_52 = arith.constant 0 : index
      %127 = vector.load %arg15[%c0_51, %c0_52] : memref<1x128xf32, #tpu.memory_space<vmem>>, vector<1x128xf32>
      %128 = math.log %127 : vector<1x128xf32>
      %129 = arith.addf %126, %128 : vector<1x128xf32>
      %c0_53 = arith.constant 0 : index
      %c0_54 = arith.constant 0 : index
      %130 = vector.load %arg13[%c0_53, %c0_54] : memref<1x128xf32, #tpu.memory_space<vmem>>, vector<1x128xf32>
      tpu.vector_store %arg13[%c0_53, %c0_54], %129 {strides = array<i32>} : memref<1x128xf32, #tpu.memory_space<vmem>>, vector<1x128xf32>,
    } else {
    }
    return
  }
  func.func @transform_0(%arg0: i32) -> (i32, i32) {
    %c0_i32 = arith.constant 0 : i32
    %c0_i32_0 = arith.constant 0 : i32
    return %arg0, %c0_i32 : i32, i32
  }
  func.func @transform_1(%arg0: i32) -> (i32, i32) {
    %c0_i32 = arith.constant 0 : i32
    %c0_i32_0 = arith.constant 0 : i32
    %c0_i32_1 = arith.constant 0 : i32
    return %c0_i32, %c0_i32_0 : i32, i32
  }
  func.func @transform_2(%arg0: i32) -> (i32, i32) {
    %c0_i32 = arith.constant 0 : i32
    %c0_i32_0 = arith.constant 0 : i32
    %c0_i32_1 = arith.constant 0 : i32
    return %c0_i32, %c0_i32_0 : i32, i32
  }
  func.func @transform_3(%arg0: i32) -> (i32, i32) {
    %c0_i32 = arith.constant 0 : i32
    %c0_i32_0 = arith.constant 0 : i32
    %c0_i32_1 = arith.constant 0 : i32
    return %c0_i32, %c0_i32_0 : i32, i32
  }
  func.func @transform_4(%arg0: i32) -> (i32, i32) {
    %c0_i32 = arith.constant 0 : i32
    %c0_i32_0 = arith.constant 0 : i32
    %c0_i32_1 = arith.constant 0 : i32
    return %c0_i32, %c0_i32_0 : i32, i32
  }
  func.func @transform_5(%arg0: i32) -> (i32, i32) {
    %c0_i32 = arith.constant 0 : i32
    %c0_i32_0 = arith.constant 0 : i32
    %c0_i32_1 = arith.constant 0 : i32
    return %c0_i32, %c0_i32_0 : i32, i32
  }
  func.func @transform_6(%arg0: i32) -> (i32, i32) {
    %c0_i32 = arith.constant 0 : i32
    %c0_i32_0 = arith.constant 0 : i32
    %c0_i32_1 = arith.constant 0 : i32
    return %c0_i32, %c0_i32_0 : i32, i32
  }
  func.func @transform_7(%arg0: i32) -> (i32, i32) {
    %c0_i32 = arith.constant 0 : i32
    %c0_i32_0 = arith.constant 0 : i32
    %c0_i32_1 = arith.constant 0 : i32
    return %c0_i32, %c0_i32_0 : i32, i32
  }
  func.func @transform_8(%arg0: i32) -> (i32, i32) {
    %c0_i32 = arith.constant 0 : i32
    %c0_i32_0 = arith.constant 0 : i32
    %c0_i32_1 = arith.constant 0 : i32
    return %c0_i32, %c0_i32_0 : i32, i32
  }
  func.func @transform_9(%arg0: i32) -> (i32, i32) {
    %c0_i32 = arith.constant 0 : i32
    %c0_i32_0 = arith.constant 0 : i32
    %c0_i32_1 = arith.constant 0 : i32
    return %c0_i32, %c0_i32_0 : i32, i32
  }
  func.func @transform_10(%arg0: i32) -> (i32, i32) {
    %c0_i32 = arith.constant 0 : i32
    %c0_i32_0 = arith.constant 0 : i32
    %c0_i32_1 = arith.constant 0 : i32
    return %c0_i32, %c0_i32_0 : i32, i32
  }
  func.func @transform_11(%arg0: i32) -> (i32, i32) {
    %c0_i32 = arith.constant 0 : i32
    %c0_i32_0 = arith.constant 0 : i32
    return %arg0, %c0_i32 : i32, i32
  }
  func.func @transform_12(%arg0: i32) -> (i32, i32) {
    %c0_i32 = arith.constant 0 : i32
    %c0_i32_0 = arith.constant 0 : i32
    %c0_i32_1 = arith.constant 0 : i32
    return %c0_i32, %c0_i32_0 : i32, i32
  }
}

</mosaic_0001>

<llo_original>
// kernel: forward.3
$region0: #{forward.3}
  #allocation0 [shape = 'u32[]', space=smem, size = 0x4, offset = 0x4, fixed_abs, tag = 'smem constant byte address 0x4 - core index']
  #allocation1 [shape = 'u32[144,128]{1,0:T(1,128)}', space=vmem, size = 0x12000, scoped, tag = 'internal scratch']
  %s0 = inlined_call_operand.vmem [shape: f32[8,128], index: 0, kind: input, shape index: {}]
  %s1 = inlined_call_operand.vmem [shape: f32[1,128], index: 1, kind: input, shape index: {}]
  %s2 = inlined_call_operand.hbm [shape: f32[8,128], index: 2, kind: output, shape index: {}]
  %s3 = sld [smem:[#allocation0]]
  $region18: #{forward.3} parent=0
    _
  %s5 = ssub.s32 1, %s3
  %s6 = scalar_select 0, %s5, %s3
  $region1: #{forward.3} parent=0
    #allocation2 [shape = 'u8[4096]{0}', space=vmem, size = 0x1000, scoped, tag = 'output window, operand 0, single buffered']
    #allocation3 [shape = 's32[1]{0}', space=sflag, size = 0x4, scoped, tag = 'scoped memory for forward.3']
    %7 = vsyncpa [#allocation3], 0
    // Predicated region
    $region2: #{forward.3} parent=1 // pred_check
      _
    $region3: #{forward.3} parent=1 // pred_check_branch
      %9 = sbr.rel (0) target = $region5
    $region4: #{forward.3} parent=1 // pred_region
      _
    $region5: #{forward.3} parent=1 // pred_fallthru
      _
    // Predicated region
    $region6: #{forward.3} parent=1 // pred_check
      _
    $region7: #{forward.3} parent=1 // pred_check_branch
      %11 = sbr.rel (0) target = $region9
    $region8: #{forward.3} parent=1 // pred_region
      _
    $region9: #{forward.3} parent=1 // pred_fallthru
      _
    %v12 = vld [vmem:[%s0] sm:$0xff]
    %v13 = vld [vmem:[%s1] sm:$0x1]
    %v15 = vlaneseq
    %v16 = vshrl.u32 %v15, 7
    %v17 = vsub.s32 0, %v16
    %v18 = vrot.slane %v13, %v17
    %v20 = vsub.f32 %v12, %v18
    %21 = vst [vmem:[#allocation2] sm:$0xff] %v20
    // Predicated region
    $region10: #{forward.3} parent=1 // pred_check
      _
    $region11: #{forward.3} parent=1 // pred_check_branch
      %23 = sbr.rel (0) target = $region13
    $region12: #{forward.3} parent=1 // pred_region
      %s25 = ssub.s32 128, 128
      %26 = vsyncadd [#allocation3], %s25
      %s28 = sshll.u32 [#allocation2], 4
      %s29 = int_to_ptr.vmem [resolvable:$true] %s28
      %31 = dma.vmem_to_hbm [thread:$0]  %s29, 128, %s2, [#allocation3]
    $region13: #{forward.3} parent=1 // pred_fallthru
      _
    // Predicated region
    $region14: #{forward.3} parent=1 // pred_check
      _
    $region15: #{forward.3} parent=1 // pred_check_branch
      %33 = sbr.rel (0) target = $region17
    $region16: #{forward.3} parent=1 // pred_region
      %34 = dma.done [#allocation3], 128
    $region17: #{forward.3} parent=1 // pred_fallthru
      _
    %35 = vsyncpa [#allocation3], 1

// kernel: forward.2
$region0: #{forward.2}
  #allocation0 [shape = 'u32[]', space=smem, size = 0x4, offset = 0x4, fixed_abs, tag = 'smem constant byte address 0x4 - core index']
  #allocation1 [shape = 'u32[144,128]{1,0:T(1,128)}', space=vmem, size = 0x12000, scoped, tag = 'internal scratch']
  #allocation2 [shape = 'f32[1,128]{1,0:T(1,128)}', space=vmem, size = 0x200, scoped, tag = 'scratch operand']
  #allocation3 [shape = 'f32[1,128]{1,0:T(1,128)}', space=vmem, size = 0x200, scoped, tag = 'scratch operand']
  %s0 = inlined_call_operand.vmem [shape: f32[8,784], index: 0, kind: input, shape index: {}]
  %s1 = inlined_call_operand.vmem [shape: f32[784,128], index: 1, kind: input, shape index: {}]
  %s2 = inlined_call_operand.vmem [shape: f32[1,128], index: 2, kind: input, shape index: {}]
  %s3 = inlined_call_operand.vmem [shape: f32[4,128], index: 3, kind: input, shape index: {}]
  %s4 = inlined_call_operand.vmem [shape: f32[4,128], index: 4, kind: input, shape index: {}]
  %s5 = inlined_call_operand.hbm [shape: f32[128,128], index: 5, kind: input, shape index: {}]
  %s6 = inlined_call_operand.vmem [shape: f32[1,128], index: 6, kind: input, shape index: {}]
  %s7 = inlined_call_operand.vmem [shape: f32[3,128], index: 7, kind: input, shape index: {}]
  %s8 = inlined_call_operand.vmem [shape: f32[3,128], index: 8, kind: input, shape index: {}]
  %s9 = inlined_call_operand.hbm [shape: f32[128,128], index: 9, kind: input, shape index: {}]
  %s10 = inlined_call_operand.vmem [shape: f32[1,128], index: 10, kind: input, shape index: {}]
  %s11 = inlined_call_operand.vmem [shape: f32[8,128], index: 11, kind: output, shape index: {0}]
  %s12 = inlined_call_operand.vmem [shape: f32[1,128], index: 12, kind: output, shape index: {1}]
  %13 = xla_tuple %s11, %s12
  %s14 = sld [smem:[#allocation0]]
  $region78: #{forward.2} parent=0
    _
  %s16 = ssub.s32 1, %s14
  %s17 = scalar_select 0, %s16, %s14
  $region1: #{forward.2} parent=0
    #allocation4 [shape = 'u8[65536]{0}', space=vmem, size = 0x10000, scoped, tag = 'input window, operand 5, single buffered']
    #allocation5 [shape = 's32[1]{0}', space=sflag, size = 0x4, scoped, tag = 'scoped memory for forward.2']
    #allocation6 [shape = 'u8[65536]{0}', space=vmem, size = 0x10000, scoped, tag = 'input window, operand 9, single buffered']
    #allocation7 [shape = 's32[1]{0}', space=sflag, size = 0x4, scoped, tag = 'scoped memory for forward.2']
    %18 = vsyncpa [#allocation5], 0
    %19 = vsyncpa [#allocation7], 0
    // Predicated region
    $region2: #{forward.2} parent=1 // pred_check
      _
    $region3: #{forward.2} parent=1 // pred_check_branch
      %21 = sbr.rel (0) target = $region5
    $region4: #{forward.2} parent=1 // pred_region
      _
    $region5: #{forward.2} parent=1 // pred_fallthru
      _
    // Predicated region
    $region6: #{forward.2} parent=1 // pred_check
      _
    $region7: #{forward.2} parent=1 // pred_check_branch
      %23 = sbr.rel (0) target = $region9
    $region8: #{forward.2} parent=1 // pred_region
      _
    $region9: #{forward.2} parent=1 // pred_fallthru
      _
    // Predicated region
    $region10: #{forward.2} parent=1 // pred_check
      _
    $region11: #{forward.2} parent=1 // pred_check_branch
      %25 = sbr.rel (0) target = $region13
    $region12: #{forward.2} parent=1 // pred_region
      _
    $region13: #{forward.2} parent=1 // pred_fallthru
      _
    // Predicated region
    $region14: #{forward.2} parent=1 // pred_check
      _
    $region15: #{forward.2} parent=1 // pred_check_branch
      %27 = sbr.rel (0) target = $region17
    $region16: #{forward.2} parent=1 // pred_region
      _
    $region17: #{forward.2} parent=1 // pred_fallthru
      _
    // Predicated region
    $region18: #{forward.2} parent=1 // pred_check
      _
    $region19: #{forward.2} parent=1 // pred_check_branch
      %29 = sbr.rel (0) target = $region21
    $region20: #{forward.2} parent=1 // pred_region
      _
    $region21: #{forward.2} parent=1 // pred_fallthru
      _
    // Predicated region
    $region22: #{forward.2} parent=1 // pred_check
      _
    $region23: #{forward.2} parent=1 // pred_check_branch
      %31 = sbr.rel (0) target = $region25
    $region24: #{forward.2} parent=1 // pred_region
      %s33 = ssub.s32 2048, 2048
      %34 = vsyncadd [#allocation5], %s33
      %s35 = sshll.u32 [#allocation4], 4
      %s36 = int_to_ptr.vmem [resolvable:$true] %s35
      %41 = dma.hbm_to_vmem [thread:$0]  %s5, 2048, %s36, [#allocation5], 128, 128, 8
    $region25: #{forward.2} parent=1 // pred_fallthru
      _
    // Predicated region
    $region26: #{forward.2} parent=1 // pred_check
      _
    $region27: #{forward.2} parent=1 // pred_check_branch
      %43 = sbr.rel (0) target = $region29
    $region28: #{forward.2} parent=1 // pred_region
      _
    $region29: #{forward.2} parent=1 // pred_fallthru
      _
    // Predicated region
    $region30: #{forward.2} parent=1 // pred_check
      _
    $region31: #{forward.2} parent=1 // pred_check_branch
      %45 = sbr.rel (0) target = $region33
    $region32: #{forward.2} parent=1 // pred_region
      _
    $region33: #{forward.2} parent=1 // pred_fallthru
      _
    // Predicated region
    $region34: #{forward.2} parent=1 // pred_check
      _
    $region35: #{forward.2} parent=1 // pred_check_branch
      %47 = sbr.rel (0) target = $region37
    $region36: #{forward.2} parent=1 // pred_region
      _
    $region37: #{forward.2} parent=1 // pred_fallthru
      _
    // Predicated region
    $region38: #{forward.2} parent=1 // pred_check
      _
    $region39: #{forward.2} parent=1 // pred_check_branch
      %49 = sbr.rel (0) target = $region41
    $region40: #{forward.2} parent=1 // pred_region
      %s51 = ssub.s32 2048, 2048
      %52 = vsyncadd [#allocation7], %s51
      %s53 = sshll.u32 [#allocation6], 4
      %s54 = int_to_ptr.vmem [resolvable:$true] %s53
      %59 = dma.hbm_to_vmem [thread:$0]  %s9, 2048, %s54, [#allocation7], 128, 128, 8
    $region41: #{forward.2} parent=1 // pred_fallthru
      _
    // Predicated region
    $region42: #{forward.2} parent=1 // pred_check
      _
    $region43: #{forward.2} parent=1 // pred_check_branch
      %61 = sbr.rel (0) target = $region45
    $region44: #{forward.2} parent=1 // pred_region
      _
    $region45: #{forward.2} parent=1 // pred_fallthru
      _
    // Predicated region
    $region46: #{forward.2} parent=1 // pred_check
      _
    $region47: #{forward.2} parent=1 // pred_check_branch
      %63 = sbr.rel (0) target = $region49
    $region48: #{forward.2} parent=1 // pred_region
      %64 = dma.done [#allocation5], 2048
    $region49: #{forward.2} parent=1 // pred_fallthru
      _
    // Predicated region
    $region50: #{forward.2} parent=1 // pred_check
      _
    $region51: #{forward.2} parent=1 // pred_check_branch
      %66 = sbr.rel (0) target = $region53
    $region52: #{forward.2} parent=1 // pred_region
      %67 = dma.done [#allocation7], 2048
    $region53: #{forward.2} parent=1 // pred_fallthru
      _
    %v68 = vld [vmem:[%s0] sm:$0xff]
    %v69 = vld [vmem:[%s0 + $0x8] sm:$0xff]
    %v70 = vld [vmem:[%s0 + $0x10] sm:$0xff]
    %v71 = vld [vmem:[%s0 + $0x18] sm:$0xff]
    %v72 = vld [vmem:[%s0 + $0x20] sm:$0xff]
    %v73 = vld [vmem:[%s0 + $0x28] sm:$0xff]
    %v74 = vld [vmem:[%s0 + $0x30] sm:$0xff]
    %v75 = vld [vmem:[%s1] sm:$0xff]
    %v76 = vld [vmem:[%s1 + $0x8] sm:$0xff]
    %v77 = vld [vmem:[%s1 + $0x10] sm:$0xff]
    %v78 = vld [vmem:[%s1 + $0x18] sm:$0xff]
    %v79 = vld [vmem:[%s1 + $0x20] sm:$0xff]
    %v80 = vld [vmem:[%s1 + $0x28] sm:$0xff]
    %v81 = vld [vmem:[%s1 + $0x30] sm:$0xff]
    %v82 = vld [vmem:[%s1 + $0x38] sm:$0xff]
    %v83 = vld [vmem:[%s1 + $0x40] sm:$0xff]
    %v84 = vld [vmem:[%s1 + $0x48] sm:$0xff]
    %v85 = vld [vmem:[%s1 + $0x50] sm:$0xff]
    %v86 = vld [vmem:[%s1 + $0x58] sm:$0xff]
    %v87 = vld [vmem:[%s1 + $0x60] sm:$0xff]
    %v88 = vld [vmem:[%s1 + $0x68] sm:$0xff]
    %v89 = vld [vmem:[%s1 + $0x70] sm:$0xff]
    %v90 = vld [vmem:[%s1 + $0x78] sm:$0xff]
    %v91 = vld [vmem:[%s1 + $0x80] sm:$0xff]
    %v92 = vld [vmem:[%s1 + $0x88] sm:$0xff]
    %v93 = vld [vmem:[%s1 + $0x90] sm:$0xff]
    %v94 = vld [vmem:[%s1 + $0x98] sm:$0xff]
    %v95 = vld [vmem:[%s1 + $0xa0] sm:$0xff]
    %v96 = vld [vmem:[%s1 + $0xa8] sm:$0xff]
    %v97 = vld [vmem:[%s1 + $0xb0] sm:$0xff]
    %v98 = vld [vmem:[%s1 + $0xb8] sm:$0xff]
    %v99 = vld [vmem:[%s1 + $0xc0] sm:$0xff]
    %v100 = vld [vmem:[%s1 + $0xc8] sm:$0xff]
    %v101 = vld [vmem:[%s1 + $0xd0] sm:$0xff]
    %v102 = vld [vmem:[%s1 + $0xd8] sm:$0xff]
    %v103 = vld [vmem:[%s1 + $0xe0] sm:$0xff]
    %v104 = vld [vmem:[%s1 + $0xe8] sm:$0xff]
    %v105 = vld [vmem:[%s1 + $0xf0] sm:$0xff]
    %v106 = vld [vmem:[%s1 + $0xf8] sm:$0xff]
    %v107 = vld [vmem:[%s1 + $0x100] sm:$0xff]
    %v108 = vld [vmem:[%s1 + $0x108] sm:$0xff]
    %v109 = vld [vmem:[%s1 + $0x110] sm:$0xff]
    %v110 = vld [vmem:[%s1 + $0x118] sm:$0xff]
    %v111 = vld [vmem:[%s1 + $0x120] sm:$0xff]
    %v112 = vld [vmem:[%s1 + $0x128] sm:$0xff]
    %v113 = vld [vmem:[%s1 + $0x130] sm:$0xff]
    %v114 = vld [vmem:[%s1 + $0x138] sm:$0xff]
    %v115 = vld [vmem:[%s1 + $0x140] sm:$0xff]
    %v116 = vld [vmem:[%s1 + $0x148] sm:$0xff]
    %v117 = vld [vmem:[%s1 + $0x150] sm:$0xff]
    %v118 = vld [vmem:[%s1 + $0x158] sm:$0xff]
    %v119 = vld [vmem:[%s1 + $0x160] sm:$0xff]
    %v120 = vld [vmem:[%s1 + $0x168] sm:$0xff]
    %v121 = vld [vmem:[%s1 + $0x170] sm:$0xff]
    %v122 = vld [vmem:[%s1 + $0x178] sm:$0xff]
    %v123 = vld [vmem:[%s1 + $0x180] sm:$0xff]
    %v124 = vld [vmem:[%s1 + $0x188] sm:$0xff]
    %v125 = vld [vmem:[%s1 + $0x190] sm:$0xff]
    %v126 = vld [vmem:[%s1 + $0x198] sm:$0xff]
    %v127 = vld [vmem:[%s1 + $0x1a0] sm:$0xff]
    %v128 = vld [vmem:[%s1 + $0x1a8] sm:$0xff]
    %v129 = vld [vmem:[%s1 + $0x1b0] sm:$0xff]
    %v130 = vld [vmem:[%s1 + $0x1b8] sm:$0xff]
    %v131 = vld [vmem:[%s1 + $0x1c0] sm:$0xff]
    %v132 = vld [vmem:[%s1 + $0x1c8] sm:$0xff]
    %v133 = vld [vmem:[%s1 + $0x1d0] sm:$0xff]
    %v134 = vld [vmem:[%s1 + $0x1d8] sm:$0xff]
    %v135 = vld [vmem:[%s1 + $0x1e0] sm:$0xff]
    %v136 = vld [vmem:[%s1 + $0x1e8] sm:$0xff]
    %v137 = vld [vmem:[%s1 + $0x1f0] sm:$0xff]
    %v138 = vld [vmem:[%s1 + $0x1f8] sm:$0xff]
    %v139 = vld [vmem:[%s1 + $0x200] sm:$0xff]
    %v140 = vld [vmem:[%s1 + $0x208] sm:$0xff]
    %v141 = vld [vmem:[%s1 + $0x210] sm:$0xff]
    %v142 = vld [vmem:[%s1 + $0x218] sm:$0xff]
    %v143 = vld [vmem:[%s1 + $0x220] sm:$0xff]
    %v144 = vld [vmem:[%s1 + $0x228] sm:$0xff]
    %v145 = vld [vmem:[%s1 + $0x230] sm:$0xff]
    %v146 = vld [vmem:[%s1 + $0x238] sm:$0xff]
    %v147 = vld [vmem:[%s1 + $0x240] sm:$0xff]
    %v148 = vld [vmem:[%s1 + $0x248] sm:$0xff]
    %v149 = vld [vmem:[%s1 + $0x250] sm:$0xff]
    %v150 = vld [vmem:[%s1 + $0x258] sm:$0xff]
    %v151 = vld [vmem:[%s1 + $0x260] sm:$0xff]
    %v152 = vld [vmem:[%s1 + $0x268] sm:$0xff]
    %v153 = vld [vmem:[%s1 + $0x270] sm:$0xff]
    %v154 = vld [vmem:[%s1 + $0x278] sm:$0xff]
    %v155 = vld [vmem:[%s1 + $0x280] sm:$0xff]
    %v156 = vld [vmem:[%s1 + $0x288] sm:$0xff]
    %v157 = vld [vmem:[%s1 + $0x290] sm:$0xff]
    %v158 = vld [vmem:[%s1 + $0x298] sm:$0xff]
    %v159 = vld [vmem:[%s1 + $0x2a0] sm:$0xff]
    %v160 = vld [vmem:[%s1 + $0x2a8] sm:$0xff]
    %v161 = vld [vmem:[%s1 + $0x2b0] sm:$0xff]
    %v162 = vld [vmem:[%s1 + $0x2b8] sm:$0xff]
    %v163 = vld [vmem:[%s1 + $0x2c0] sm:$0xff]
    %v164 = vld [vmem:[%s1 + $0x2c8] sm:$0xff]
    %v165 = vld [vmem:[%s1 + $0x2d0] sm:$0xff]
    %v166 = vld [vmem:[%s1 + $0x2d8] sm:$0xff]
    %v167 = vld [vmem:[%s1 + $0x2e0] sm:$0xff]
    %v168 = vld [vmem:[%s1 + $0x2e8] sm:$0xff]
    %v169 = vld [vmem:[%s1 + $0x2f0] sm:$0xff]
    %v170 = vld [vmem:[%s1 + $0x2f8] sm:$0xff]
    %v171 = vld [vmem:[%s1 + $0x300] sm:$0xff]
    %v172 = vld [vmem:[%s1 + $0x308] sm:$0xff]
    %v173 = vld [vmem:[%s2] sm:$0x1]
    %v175 = vlaneseq
    %v176 = vshrl.u32 %v175, 7
    %v177 = vsub.s32 0, %v176
    %v178 = vrot.slane %v173, %v177
    %vm180 = vcmask 130048
    %v182 = vsel %vm180, %v74, 0
    %184 = vmatprep.subr.mxu0 0.0
    %185 = vmatpush1.msra.mxu0 %v90
    %186 = vmatprep.subr.mxu0 0.0
    %187 = vmatpush1.msra.mxu0 %v89
    %188 = vmatprep.subr.mxu0 0.0
    %189 = vmatpush1.msra.mxu0 %v88
    %190 = vmatprep.subr.mxu0 0.0
    %191 = vmatpush1.msra.mxu0 %v87
    %192 = vmatprep.subr.mxu0 0.0
    %193 = vmatpush1.msra.mxu0 %v86
    %194 = vmatprep.subr.mxu0 0.0
    %195 = vmatpush1.msra.mxu0 %v85
    %196 = vmatprep.subr.mxu0 0.0
    %197 = vmatpush1.msra.mxu0 %v84
    %198 = vmatprep.subr.mxu0 0.0
    %199 = vmatpush1.msra.mxu0 %v83
    %200 = vmatprep.subr.mxu0 0.0
    %201 = vmatpush1.msra.mxu0 %v82
    %202 = vmatprep.subr.mxu0 0.0
    %203 = vmatpush1.msra.mxu0 %v81
    %204 = vmatprep.subr.mxu0 0.0
    %205 = vmatpush1.msra.mxu0 %v80
    %206 = vmatprep.subr.mxu0 0.0
    %207 = vmatpush1.msra.mxu0 %v79
    %208 = vmatprep.subr.mxu0 0.0
    %209 = vmatpush1.msra.mxu0 %v78
    %210 = vmatprep.subr.mxu0 0.0
    %211 = vmatpush1.msra.mxu0 %v77
    %212 = vmatprep.subr.mxu0 0.0
    %213 = vmatpush1.msra.mxu0 %v76
    %214 = vmatprep.subr.mxu0 0.0
    %215 = vmatpush1.msra.mxu0 %v75
    %216 = vmatprep.subr.mxu0 0.0
    %217 = vmatpush2.msra.mxu0 %v106
    %218 = vmatprep.subr.mxu0 0.0
    %219 = vmatpush2.msra.mxu0 %v105
    %220 = vmatprep.subr.mxu0 0.0
    %221 = vmatpush2.msra.mxu0 %v104
    %222 = vmatprep.subr.mxu0 0.0
    %223 = vmatpush2.msra.mxu0 %v103
    %224 = vmatprep.subr.mxu0 0.0
    %225 = vmatpush2.msra.mxu0 %v102
    %226 = vmatprep.subr.mxu0 0.0
    %227 = vmatpush2.msra.mxu0 %v101
    %228 = vmatprep.subr.mxu0 0.0
    %229 = vmatpush2.msra.mxu0 %v100
    %230 = vmatprep.subr.mxu0 0.0
    %231 = vmatpush2.msra.mxu0 %v99
    %232 = vmatprep.subr.mxu0 0.0
    %233 = vmatpush2.msra.mxu0 %v98
    %234 = vmatprep.subr.mxu0 0.0
    %235 = vmatpush2.msra.mxu0 %v97
    %236 = vmatprep.subr.mxu0 0.0
    %237 = vmatpush2.msra.mxu0 %v96
    %238 = vmatprep.subr.mxu0 0.0
    %239 = vmatpush2.msra.mxu0 %v95
    %240 = vmatprep.subr.mxu0 0.0
    %241 = vmatpush2.msra.mxu0 %v94
    %242 = vmatprep.subr.mxu0 0.0
    %243 = vmatpush2.msra.mxu0 %v93
    %244 = vmatprep.subr.mxu0 0.0
    %245 = vmatpush2.msra.mxu0 %v92
    %246 = vmatprep.subr.mxu0 0.0
    %247 = vmatpush2.msra.mxu0 %v91
    %248 = vmatprep.mubr.f32.mxu0 %v69
    %249 = vmatmul.mubr.f32.gmra.mxu0 %v68
    %v250 = vpop.f32.mrf.mxu0
    %v251 = vadd.f32 %v178, %v250
    %v252 = vpop.f32.mrf.mxu0
    %253 = vdwg.mxu0
    %254 = vmatprep.subr.mxu0 0.0
    %255 = vmatpush1.msra.mxu0 %v122
    %256 = vmatprep.subr.mxu0 0.0
    %257 = vmatpush1.msra.mxu0 %v121
    %258 = vmatprep.subr.mxu0 0.0
    %259 = vmatpush1.msra.mxu0 %v120
    %260 = vmatprep.subr.mxu0 0.0
    %261 = vmatpush1.msra.mxu0 %v119
    %262 = vmatprep.subr.mxu0 0.0
    %263 = vmatpush1.msra.mxu0 %v118
    %264 = vmatprep.subr.mxu0 0.0
    %265 = vmatpush1.msra.mxu0 %v117
    %266 = vmatprep.subr.mxu0 0.0
    %267 = vmatpush1.msra.mxu0 %v116
    %268 = vmatprep.subr.mxu0 0.0
    %269 = vmatpush1.msra.mxu0 %v115
    %270 = vmatprep.subr.mxu0 0.0
    %271 = vmatpush1.msra.mxu0 %v114
    %272 = vmatprep.subr.mxu0 0.0
    %273 = vmatpush1.msra.mxu0 %v113
    %274 = vmatprep.subr.mxu0 0.0
    %275 = vmatpush1.msra.mxu0 %v112
    %276 = vmatprep.subr.mxu0 0.0
    %277 = vmatpush1.msra.mxu0 %v111
    %278 = vmatprep.subr.mxu0 0.0
    %279 = vmatpush1.msra.mxu0 %v110
    %280 = vmatprep.subr.mxu0 0.0
    %281 = vmatpush1.msra.mxu0 %v109
    %282 = vmatprep.subr.mxu0 0.0
    %283 = vmatpush1.msra.mxu0 %v108
    %284 = vmatprep.subr.mxu0 0.0
    %285 = vmatpush1.msra.mxu0 %v107
    %286 = vmatprep.subr.mxu0 0.0
    %287 = vmatpush2.msra.mxu0 %v138
    %288 = vmatprep.subr.mxu0 0.0
    %289 = vmatpush2.msra.mxu0 %v137
    %290 = vmatprep.subr.mxu0 0.0
    %291 = vmatpush2.msra.mxu0 %v136
    %292 = vmatprep.subr.mxu0 0.0
    %293 = vmatpush2.msra.mxu0 %v135
    %294 = vmatprep.subr.mxu0 0.0
    %295 = vmatpush2.msra.mxu0 %v134
    %296 = vmatprep.subr.mxu0 0.0
    %297 = vmatpush2.msra.mxu0 %v133
    %298 = vmatprep.subr.mxu0 0.0
    %299 = vmatpush2.msra.mxu0 %v132
    %300 = vmatprep.subr.mxu0 0.0
    %301 = vmatpush2.msra.mxu0 %v131
    %302 = vmatprep.subr.mxu0 0.0
    %303 = vmatpush2.msra.mxu0 %v130
    %304 = vmatprep.subr.mxu0 0.0
    %305 = vmatpush2.msra.mxu0 %v129
    %306 = vmatprep.subr.mxu0 0.0
    %307 = vmatpush2.msra.mxu0 %v128
    %308 = vmatprep.subr.mxu0 0.0
    %309 = vmatpush2.msra.mxu0 %v127
    %310 = vmatprep.subr.mxu0 0.0
    %311 = vmatpush2.msra.mxu0 %v126
    %312 = vmatprep.subr.mxu0 0.0
    %313 = vmatpush2.msra.mxu0 %v125
    %314 = vmatprep.subr.mxu0 0.0
    %315 = vmatpush2.msra.mxu0 %v124
    %316 = vmatprep.subr.mxu0 0.0
    %317 = vmatpush2.msra.mxu0 %v123
    %318 = vmatprep.mubr.f32.mxu0 %v71
    %319 = vmatmul.mubr.f32.gmra.mxu0 %v70
    %v320 = vpop.f32.mrf.mxu0
    %v321 = vadd.f32 %v251, %v320
    %v322 = vpop.f32.mrf.mxu0
    %323 = vdwg.mxu0
    %324 = vmatprep.subr.mxu0 0.0
    %325 = vmatpush1.msra.mxu0 %v154
    %326 = vmatprep.subr.mxu0 0.0
    %327 = vmatpush1.msra.mxu0 %v153
    %328 = vmatprep.subr.mxu0 0.0
    %329 = vmatpush1.msra.mxu0 %v152
    %330 = vmatprep.subr.mxu0 0.0
    %331 = vmatpush1.msra.mxu0 %v151
    %332 = vmatprep.subr.mxu0 0.0
    %333 = vmatpush1.msra.mxu0 %v150
    %334 = vmatprep.subr.mxu0 0.0
    %335 = vmatpush1.msra.mxu0 %v149
    %336 = vmatprep.subr.mxu0 0.0
    %337 = vmatpush1.msra.mxu0 %v148
    %338 = vmatprep.subr.mxu0 0.0
    %339 = vmatpush1.msra.mxu0 %v147
    %340 = vmatprep.subr.mxu0 0.0
    %341 = vmatpush1.msra.mxu0 %v146
    %342 = vmatprep.subr.mxu0 0.0
    %343 = vmatpush1.msra.mxu0 %v145
    %344 = vmatprep.subr.mxu0 0.0
    %345 = vmatpush1.msra.mxu0 %v144
    %346 = vmatprep.subr.mxu0 0.0
    %347 = vmatpush1.msra.mxu0 %v143
    %348 = vmatprep.subr.mxu0 0.0
    %349 = vmatpush1.msra.mxu0 %v142
    %350 = vmatprep.subr.mxu0 0.0
    %351 = vmatpush1.msra.mxu0 %v141
    %352 = vmatprep.subr.mxu0 0.0
    %353 = vmatpush1.msra.mxu0 %v140
    %354 = vmatprep.subr.mxu0 0.0
    %355 = vmatpush1.msra.mxu0 %v139
    %356 = vmatprep.subr.mxu0 0.0
    %357 = vmatpush2.msra.mxu0 %v170
    %358 = vmatprep.subr.mxu0 0.0
    %359 = vmatpush2.msra.mxu0 %v169
    %360 = vmatprep.subr.mxu0 0.0
    %361 = vmatpush2.msra.mxu0 %v168
    %362 = vmatprep.subr.mxu0 0.0
    %363 = vmatpush2.msra.mxu0 %v167
    %364 = vmatprep.subr.mxu0 0.0
    %365 = vmatpush2.msra.mxu0 %v166
    %366 = vmatprep.subr.mxu0 0.0
    %367 = vmatpush2.msra.mxu0 %v165
    %368 = vmatprep.subr.mxu0 0.0
    %369 = vmatpush2.msra.mxu0 %v164
    %370 = vmatprep.subr.mxu0 0.0
    %371 = vmatpush2.msra.mxu0 %v163
    %372 = vmatprep.subr.mxu0 0.0
    %373 = vmatpush2.msra.mxu0 %v162
    %374 = vmatprep.subr.mxu0 0.0
    %375 = vmatpush2.msra.mxu0 %v161
    %376 = vmatprep.subr.mxu0 0.0
    %377 = vmatpush2.msra.mxu0 %v160
    %378 = vmatprep.subr.mxu0 0.0
    %379 = vmatpush2.msra.mxu0 %v159
    %380 = vmatprep.subr.mxu0 0.0
    %381 = vmatpush2.msra.mxu0 %v158
    %382 = vmatprep.subr.mxu0 0.0
    %383 = vmatpush2.msra.mxu0 %v157
    %384 = vmatprep.subr.mxu0 0.0
    %385 = vmatpush2.msra.mxu0 %v156
    %386 = vmatprep.subr.mxu0 0.0
    %387 = vmatpush2.msra.mxu0 %v155
    %388 = vmatprep.mubr.f32.mxu0 %v73
    %389 = vmatmul.mubr.f32.gmra.mxu0 %v72
    %v390 = vpop.f32.mrf.mxu0
    %v391 = vadd.f32 %v321, %v390
    %v392 = vpop.f32.mrf.mxu0
    %393 = vdwg.mxu0
    %394 = vmatprep.subr.mxu0 0.0
    %395 = vmatpush1.msra.mxu0 0.0
    %396 = vmatprep.subr.mxu0 0.0
    %397 = vmatpush1.msra.mxu0 0.0
    %398 = vmatprep.subr.mxu0 0.0
    %399 = vmatpush1.msra.mxu0 0.0
    %400 = vmatprep.subr.mxu0 0.0
    %401 = vmatpush1.msra.mxu0 0.0
    %402 = vmatprep.subr.mxu0 0.0
    %403 = vmatpush1.msra.mxu0 0.0
    %404 = vmatprep.subr.mxu0 0.0
    %405 = vmatpush1.msra.mxu0 0.0
    %406 = vmatprep.subr.mxu0 0.0
    %407 = vmatpush1.msra.mxu0 0.0
    %408 = vmatprep.subr.mxu0 0.0
    %409 = vmatpush1.msra.mxu0 0.0
    %410 = vmatprep.subr.mxu0 0.0
    %411 = vmatpush1.msra.mxu0 0.0
    %412 = vmatprep.subr.mxu0 0.0
    %413 = vmatpush1.msra.mxu0 0.0
    %414 = vmatprep.subr.mxu0 0.0
    %415 = vmatpush1.msra.mxu0 0.0
    %416 = vmatprep.subr.mxu0 0.0
    %417 = vmatpush1.msra.mxu0 0.0
    %418 = vmatprep.subr.mxu0 0.0
    %419 = vmatpush1.msra.mxu0 0.0
    %420 = vmatprep.subr.mxu0 0.0
    %421 = vmatpush1.msra.mxu0 0.0
    %422 = vmatprep.subr.mxu0 0.0
    %423 = vmatpush1.msra.mxu0 %v172
    %424 = vmatprep.subr.mxu0 0.0
    %425 = vmatpush1.msra.mxu0 %v171
    %426 = vmatprep.subr.mxu0 0.0
    %427 = vmatpush2.msra.mxu0 0.0
    %428 = vmatprep.subr.mxu0 0.0
    %429 = vmatpush2.msra.mxu0 0.0
    %430 = vmatprep.subr.mxu0 0.0
    %431 = vmatpush2.msra.mxu0 0.0
    %432 = vmatprep.subr.mxu0 0.0
    %433 = vmatpush2.msra.mxu0 0.0
    %434 = vmatprep.subr.mxu0 0.0
    %435 = vmatpush2.msra.mxu0 0.0
    %436 = vmatprep.subr.mxu0 0.0
    %437 = vmatpush2.msra.mxu0 0.0
    %438 = vmatprep.subr.mxu0 0.0
    %439 = vmatpush2.msra.mxu0 0.0
    %440 = vmatprep.subr.mxu0 0.0
    %441 = vmatpush2.msra.mxu0 0.0
    %442 = vmatprep.subr.mxu0 0.0
    %443 = vmatpush2.msra.mxu0 0.0
    %444 = vmatprep.subr.mxu0 0.0
    %445 = vmatpush2.msra.mxu0 0.0
    %446 = vmatprep.subr.mxu0 0.0
    %447 = vmatpush2.msra.mxu0 0.0
    %448 = vmatprep.subr.mxu0 0.0
    %449 = vmatpush2.msra.mxu0 0.0
    %450 = vmatprep.subr.mxu0 0.0
    %451 = vmatpush2.msra.mxu0 0.0
    %452 = vmatprep.subr.mxu0 0.0
    %453 = vmatpush2.msra.mxu0 0.0
    %454 = vmatprep.subr.mxu0 0.0
    %455 = vmatpush2.msra.mxu0 0.0
    %456 = vmatprep.subr.mxu0 0.0
    %457 = vmatpush2.msra.mxu0 0.0
    %458 = vmatprep.mubr.f32.mxu0 0.0
    %459 = vmatmul.mubr.f32.gmra.mxu0 %v182
    %v460 = vpop.f32.mrf.mxu0
    %v461 = vadd.f32 %v391, %v460
    %v462 = vpop.f32.mrf.mxu0
    %463 = vdwg.mxu0
    %v464 = vld [vmem:[%s3] sm:$0xf]
    %v465 = vld [vmem:[%s4] sm:$0xf]
    %v466 = vmul.f32 %v461, 0.8396893
    %v467 = vlaneseq
    %v468 = vshrl.u32 %v467, 7
    %v469 = vsub.s32 0, %v468
    %v470 = vrot.slane %v464, %v469
    %v471 = vsub.f32 %v466, %v470
    %v472 = vmul.f32 %v471, %v471
    %v473 = vsub.f32 0.0, %v472
    %v474 = vmul.f32 %v473, 1.442695
    %v475 = vpow.pop %v474
    %v476 = vlaneseq
    %v477 = vshrl.u32 %v476, 7
    %v478 = vsub.s32 0, %v477
    %v479 = vrot.slane %v465, %v478
    %v480 = vmul.f32 %v475, %v479
    %v481 = vadd.f32 %v480, 0.0
    %v482 = vlaneseq
    %v483 = vshrl.u32 %v482, 7
    %v484 = vsub.s32 1, %v483
    %v485 = vrot.slane %v464, %v484
    %v486 = vsub.f32 %v466, %v485
    %v487 = vmul.f32 %v486, %v486
    %v488 = vsub.f32 0.0, %v487
    %v489 = vmul.f32 %v488, 1.442695
    %v490 = vpow.pop %v489
    %v491 = vlaneseq
    %v492 = vshrl.u32 %v491, 7
    %v493 = vsub.s32 1, %v492
    %v494 = vrot.slane %v465, %v493
    %v495 = vmul.f32 %v490, %v494
    %v496 = vadd.f32 %v481, %v495
    %v497 = vlaneseq
    %v498 = vshrl.u32 %v497, 7
    %v499 = vsub.s32 2, %v498
    %v500 = vrot.slane %v464, %v499
    %v501 = vsub.f32 %v466, %v500
    %v502 = vmul.f32 %v501, %v501
    %v503 = vsub.f32 0.0, %v502
    %v504 = vmul.f32 %v503, 1.442695
    %v505 = vpow.pop %v504
    %v506 = vlaneseq
    %v507 = vshrl.u32 %v506, 7
    %v508 = vsub.s32 2, %v507
    %v509 = vrot.slane %v465, %v508
    %v510 = vmul.f32 %v505, %v509
    %v511 = vadd.f32 %v496, %v510
    %v512 = vlaneseq
    %v513 = vshrl.u32 %v512, 7
    %v514 = vsub.s32 3, %v513
    %v515 = vrot.slane %v464, %v514
    %v516 = vsub.f32 %v466, %v515
    %v517 = vmul.f32 %v516, %v516
    %v518 = vsub.f32 0.0, %v517
    %v519 = vmul.f32 %v518, 1.442695
    %v520 = vpow.pop %v519
    %v521 = vlaneseq
    %v522 = vshrl.u32 %v521, 7
    %v523 = vsub.s32 3, %v522
    %v524 = vrot.slane %v465, %v523
    %v525 = vmul.f32 %v520, %v524
    %v526 = vadd.f32 %v511, %v525
    %v527 = vld [vmem:[#allocation4] sm:$0xff]
    %v528 = vld [vmem:[#allocation4 + $0x8] sm:$0xff]
    %v529 = vld [vmem:[#allocation4 + $0x10] sm:$0xff]
    %v530 = vld [vmem:[#allocation4 + $0x18] sm:$0xff]
    %v531 = vld [vmem:[#allocation4 + $0x20] sm:$0xff]
    %v532 = vld [vmem:[#allocation4 + $0x28] sm:$0xff]
    %v533 = vld [vmem:[#allocation4 + $0x30] sm:$0xff]
    %v534 = vld [vmem:[#allocation4 + $0x38] sm:$0xff]
    %v535 = vld [vmem:[#allocation4 + $0x40] sm:$0xff]
    %v536 = vld [vmem:[#allocation4 + $0x48] sm:$0xff]
    %v537 = vld [vmem:[#allocation4 + $0x50] sm:$0xff]
    %v538 = vld [vmem:[#allocation4 + $0x58] sm:$0xff]
    %v539 = vld [vmem:[#allocation4 + $0x60] sm:$0xff]
    %v540 = vld [vmem:[#allocation4 + $0x68] sm:$0xff]
    %v541 = vld [vmem:[#allocation4 + $0x70] sm:$0xff]
    %v542 = vld [vmem:[#allocation4 + $0x78] sm:$0xff]
    %v543 = vld [vmem:[%s6] sm:$0x1]
    %v545 = vlaneseq
    %v546 = vshrl.u32 %v545, 7
    %v547 = vsub.s32 0, %v546
    %v548 = vrot.slane %v543, %v547
    %550 = vmatprep.subr.mxu0 0.0
    %551 = vmatpush1.msra.mxu0 %v542
    %552 = vmatprep.subr.mxu0 0.0
    %553 = vmatpush1.msra.mxu0 %v541
    %554 = vmatprep.subr.mxu0 0.0
    %555 = vmatpush1.msra.mxu0 %v540
    %556 = vmatprep.subr.mxu0 0.0
    %557 = vmatpush1.msra.mxu0 %v539
    %558 = vmatprep.subr.mxu0 0.0
    %559 = vmatpush1.msra.mxu0 %v538
    %560 = vmatprep.subr.mxu0 0.0
    %561 = vmatpush1.msra.mxu0 %v537
    %562 = vmatprep.subr.mxu0 0.0
    %563 = vmatpush1.msra.mxu0 %v536
    %564 = vmatprep.subr.mxu0 0.0
    %565 = vmatpush1.msra.mxu0 %v535
    %566 = vmatprep.subr.mxu0 0.0
    %567 = vmatpush1.msra.mxu0 %v534
    %568 = vmatprep.subr.mxu0 0.0
    %569 = vmatpush1.msra.mxu0 %v533
    %570 = vmatprep.subr.mxu0 0.0
    %571 = vmatpush1.msra.mxu0 %v532
    %572 = vmatprep.subr.mxu0 0.0
    %573 = vmatpush1.msra.mxu0 %v531
    %574 = vmatprep.subr.mxu0 0.0
    %575 = vmatpush1.msra.mxu0 %v530
    %576 = vmatprep.subr.mxu0 0.0
    %577 = vmatpush1.msra.mxu0 %v529
    %578 = vmatprep.subr.mxu0 0.0
    %579 = vmatpush1.msra.mxu0 %v528
    %580 = vmatprep.subr.mxu0 0.0
    %581 = vmatpush1.msra.mxu0 %v527
    %582 = vmatprep.subr.mxu0 0.0
    %583 = vmatpush2.msra.mxu0 0.0
    %584 = vmatprep.subr.mxu0 0.0
    %585 = vmatpush2.msra.mxu0 0.0
    %586 = vmatprep.subr.mxu0 0.0
    %587 = vmatpush2.msra.mxu0 0.0
    %588 = vmatprep.subr.mxu0 0.0
    %589 = vmatpush2.msra.mxu0 0.0
    %590 = vmatprep.subr.mxu0 0.0
    %591 = vmatpush2.msra.mxu0 0.0
    %592 = vmatprep.subr.mxu0 0.0
    %593 = vmatpush2.msra.mxu0 0.0
    %594 = vmatprep.subr.mxu0 0.0
    %595 = vmatpush2.msra.mxu0 0.0
    %596 = vmatprep.subr.mxu0 0.0
    %597 = vmatpush2.msra.mxu0 0.0
    %598 = vmatprep.subr.mxu0 0.0
    %599 = vmatpush2.msra.mxu0 0.0
    %600 = vmatprep.subr.mxu0 0.0
    %601 = vmatpush2.msra.mxu0 0.0
    %602 = vmatprep.subr.mxu0 0.0
    %603 = vmatpush2.msra.mxu0 0.0
    %604 = vmatprep.subr.mxu0 0.0
    %605 = vmatpush2.msra.mxu0 0.0
    %606 = vmatprep.subr.mxu0 0.0
    %607 = vmatpush2.msra.mxu0 0.0
    %608 = vmatprep.subr.mxu0 0.0
    %609 = vmatpush2.msra.mxu0 0.0
    %610 = vmatprep.subr.mxu0 0.0
    %611 = vmatpush2.msra.mxu0 0.0
    %612 = vmatprep.subr.mxu0 0.0
    %613 = vmatpush2.msra.mxu0 0.0
    %614 = vmatprep.mubr.f32.mxu0 0.0
    %615 = vmatmul.mubr.f32.gmra.mxu0 %v526
    %v616 = vpop.f32.mrf.mxu0
    %v617 = vadd.f32 %v548, %v616
    %v618 = vpop.f32.mrf.mxu0
    %619 = vdwg.mxu0
    %v620 = vld [vmem:[%s7] sm:$0x7]
    %v621 = vld [vmem:[%s8] sm:$0x7]
    %v622 = vmul.f32 %v617, 0.8396893
    %v623 = vlaneseq
    %v624 = vshrl.u32 %v623, 7
    %v625 = vsub.s32 0, %v624
    %v626 = vrot.slane %v620, %v625
    %v627 = vsub.f32 %v622, %v626
    %v628 = vmul.f32 %v627, %v627
    %v629 = vsub.f32 0.0, %v628
    %v630 = vmul.f32 %v629, 1.442695
    %v631 = vpow.pop %v630
    %v632 = vlaneseq
    %v633 = vshrl.u32 %v632, 7
    %v634 = vsub.s32 0, %v633
    %v635 = vrot.slane %v621, %v634
    %v636 = vmul.f32 %v631, %v635
    %v637 = vadd.f32 %v636, 0.0
    %v638 = vlaneseq
    %v639 = vshrl.u32 %v638, 7
    %v640 = vsub.s32 1, %v639
    %v641 = vrot.slane %v620, %v640
    %v642 = vsub.f32 %v622, %v641
    %v643 = vmul.f32 %v642, %v642
    %v644 = vsub.f32 0.0, %v643
    %v645 = vmul.f32 %v644, 1.442695
    %v646 = vpow.pop %v645
    %v647 = vlaneseq
    %v648 = vshrl.u32 %v647, 7
    %v649 = vsub.s32 1, %v648
    %v650 = vrot.slane %v621, %v649
    %v651 = vmul.f32 %v646, %v650
    %v652 = vadd.f32 %v637, %v651
    %v653 = vlaneseq
    %v654 = vshrl.u32 %v653, 7
    %v655 = vsub.s32 2, %v654
    %v656 = vrot.slane %v620, %v655
    %v657 = vsub.f32 %v622, %v656
    %v658 = vmul.f32 %v657, %v657
    %v659 = vsub.f32 0.0, %v658
    %v660 = vmul.f32 %v659, 1.442695
    %v661 = vpow.pop %v660
    %v662 = vlaneseq
    %v663 = vshrl.u32 %v662, 7
    %v664 = vsub.s32 2, %v663
    %v665 = vrot.slane %v621, %v664
    %v666 = vmul.f32 %v661, %v665
    %v667 = vadd.f32 %v652, %v666
    %v668 = vld [vmem:[#allocation6] sm:$0xff]
    %v669 = vld [vmem:[#allocation6 + $0x8] sm:$0xff]
    %v670 = vld [vmem:[#allocation6 + $0x10] sm:$0xff]
    %v671 = vld [vmem:[#allocation6 + $0x18] sm:$0xff]
    %v672 = vld [vmem:[#allocation6 + $0x20] sm:$0xff]
    %v673 = vld [vmem:[#allocation6 + $0x28] sm:$0xff]
    %v674 = vld [vmem:[#allocation6 + $0x30] sm:$0xff]
    %v675 = vld [vmem:[#allocation6 + $0x38] sm:$0xff]
    %v676 = vld [vmem:[#allocation6 + $0x40] sm:$0xff]
    %v677 = vld [vmem:[#allocation6 + $0x48] sm:$0xff]
    %v678 = vld [vmem:[#allocation6 + $0x50] sm:$0xff]
    %v679 = vld [vmem:[#allocation6 + $0x58] sm:$0xff]
    %v680 = vld [vmem:[#allocation6 + $0x60] sm:$0xff]
    %v681 = vld [vmem:[#allocation6 + $0x68] sm:$0xff]
    %v682 = vld [vmem:[#allocation6 + $0x70] sm:$0xff]
    %v683 = vld [vmem:[#allocation6 + $0x78] sm:$0xff]
    %v684 = vld [vmem:[%s10] sm:$0x1]
    %v686 = vlaneseq
    %v687 = vshrl.u32 %v686, 7
    %v688 = vsub.s32 0, %v687
    %v689 = vrot.slane %v684, %v688
    %691 = vmatprep.subr.mxu0 0.0
    %692 = vmatpush1.msra.mxu0 %v683
    %693 = vmatprep.subr.mxu0 0.0
    %694 = vmatpush1.msra.mxu0 %v682
    %695 = vmatprep.subr.mxu0 0.0
    %696 = vmatpush1.msra.mxu0 %v681
    %697 = vmatprep.subr.mxu0 0.0
    %698 = vmatpush1.msra.mxu0 %v680
    %699 = vmatprep.subr.mxu0 0.0
    %700 = vmatpush1.msra.mxu0 %v679
    %701 = vmatprep.subr.mxu0 0.0
    %702 = vmatpush1.msra.mxu0 %v678
    %703 = vmatprep.subr.mxu0 0.0
    %704 = vmatpush1.msra.mxu0 %v677
    %705 = vmatprep.subr.mxu0 0.0
    %706 = vmatpush1.msra.mxu0 %v676
    %707 = vmatprep.subr.mxu0 0.0
    %708 = vmatpush1.msra.mxu0 %v675
    %709 = vmatprep.subr.mxu0 0.0
    %710 = vmatpush1.msra.mxu0 %v674
    %711 = vmatprep.subr.mxu0 0.0
    %712 = vmatpush1.msra.mxu0 %v673
    %713 = vmatprep.subr.mxu0 0.0
    %714 = vmatpush1.msra.mxu0 %v672
    %715 = vmatprep.subr.mxu0 0.0
    %716 = vmatpush1.msra.mxu0 %v671
    %717 = vmatprep.subr.mxu0 0.0
    %718 = vmatpush1.msra.mxu0 %v670
    %719 = vmatprep.subr.mxu0 0.0
    %720 = vmatpush1.msra.mxu0 %v669
    %721 = vmatprep.subr.mxu0 0.0
    %722 = vmatpush1.msra.mxu0 %v668
    %723 = vmatprep.subr.mxu0 0.0
    %724 = vmatpush2.msra.mxu0 0.0
    %725 = vmatprep.subr.mxu0 0.0
    %726 = vmatpush2.msra.mxu0 0.0
    %727 = vmatprep.subr.mxu0 0.0
    %728 = vmatpush2.msra.mxu0 0.0
    %729 = vmatprep.subr.mxu0 0.0
    %730 = vmatpush2.msra.mxu0 0.0
    %731 = vmatprep.subr.mxu0 0.0
    %732 = vmatpush2.msra.mxu0 0.0
    %733 = vmatprep.subr.mxu0 0.0
    %734 = vmatpush2.msra.mxu0 0.0
    %735 = vmatprep.subr.mxu0 0.0
    %736 = vmatpush2.msra.mxu0 0.0
    %737 = vmatprep.subr.mxu0 0.0
    %738 = vmatpush2.msra.mxu0 0.0
    %739 = vmatprep.subr.mxu0 0.0
    %740 = vmatpush2.msra.mxu0 0.0
    %741 = vmatprep.subr.mxu0 0.0
    %742 = vmatpush2.msra.mxu0 0.0
    %743 = vmatprep.subr.mxu0 0.0
    %744 = vmatpush2.msra.mxu0 0.0
    %745 = vmatprep.subr.mxu0 0.0
    %746 = vmatpush2.msra.mxu0 0.0
    %747 = vmatprep.subr.mxu0 0.0
    %748 = vmatpush2.msra.mxu0 0.0
    %749 = vmatprep.subr.mxu0 0.0
    %750 = vmatpush2.msra.mxu0 0.0
    %751 = vmatprep.subr.mxu0 0.0
    %752 = vmatpush2.msra.mxu0 0.0
    %753 = vmatprep.subr.mxu0 0.0
    %754 = vmatpush2.msra.mxu0 0.0
    %755 = vmatprep.mubr.f32.mxu0 0.0
    %756 = vmatmul.mubr.f32.gmra.mxu0 %v667
    %v757 = vpop.f32.mrf.mxu0
    %v758 = vadd.f32 %v689, %v757
    %v759 = vpop.f32.mrf.mxu0
    %760 = vdwg.mxu0
    %761 = vst [vmem:[%s11] sm:$0xff] %v758
    %p762 = scmp.eq.s32.totalorder 0, 0
    // Predicated region
    $region54: #{forward.2} parent=1 // pred_check
      %p763 = pneg %p762
    $region55: #{forward.2} parent=1 // pred_check_branch
      %765 = sbr.rel (%p763) target = $region57
    $region56: #{forward.2} parent=1 // pred_region
      %766 = vst [vmem:[#allocation2] sm:$0x1] -inf
      %767 = vst [vmem:[#allocation3] sm:$0x1] 0.0
    $region57: #{forward.2} parent=1 // pred_fallthru
      _
    %v768 = vld [vmem:[#allocation2] sm:$0x1]
    %v769 = vrot.slane %v758, 4
    %v770 = vmax.f32 %v758, %v769
    %v771 = vrot.slane %v770, 2
    %v772 = vmax.f32 %v770, %v771
    %v773 = vrot.slane %v772, 1
    %v774 = vmax.f32 %v772, %v773
    %v775 = vmax.f32 %v768, %v774
    %v776 = vld [vmem:[#allocation3] sm:$0x1]
    %v777 = vsub.f32 %v768, %v775
    %v778 = vmul.f32 %v777, 1.442695
    %v779 = vpow.pop %v778
    %v780 = vmul.f32 %v776, %v779
    %v782 = vlaneseq
    %v783 = vshrl.u32 %v782, 7
    %v784 = vsub.s32 0, %v783
    %v785 = vrot.slane %v775, %v784
    %v787 = vsub.f32 %v758, %v785
    %v788 = vmul.f32 %v787, 1.442695
    %v789 = vpow.pop %v788
    %v790 = vrot.slane %v789, 4
    %v791 = vadd.f32 %v789, %v790
    %v792 = vrot.slane %v791, 2
    %v793 = vadd.f32 %v791, %v792
    %v794 = vrot.slane %v793, 1
    %v795 = vadd.f32 %v793, %v794
    %v796 = vadd.f32 %v780, %v795
    %797 = vst [vmem:[#allocation3] sm:$0x1] %v796
    %798 = vst [vmem:[#allocation2] sm:$0x1] %v775
    // Predicated region
    $region58: #{forward.2} parent=1 // pred_check
      %p799 = pneg %p762
    $region59: #{forward.2} parent=1 // pred_check_branch
      %801 = sbr.rel (%p799) target = $region61
    $region60: #{forward.2} parent=1 // pred_region
      %v802 = vld [vmem:[#allocation2] sm:$0x1]
      %v803 = vld [vmem:[#allocation3] sm:$0x1]
      %v804 = vlog2.pop %v803
      %v805 = vmul.f32 %v804, 0.6931472
      %v806 = vadd.f32 %v802, %v805
      %807 = vst [vmem:[%s12] sm:$0x1] %v806
    $region61: #{forward.2} parent=1 // pred_fallthru
      _
    // Predicated region
    $region62: #{forward.2} parent=1 // pred_check
      _
    $region63: #{forward.2} parent=1 // pred_check_branch
      %809 = sbr.rel (0) target = $region65
    $region64: #{forward.2} parent=1 // pred_region
      _
    $region65: #{forward.2} parent=1 // pred_fallthru
      _
    // Predicated region
    $region66: #{forward.2} parent=1 // pred_check
      _
    $region67: #{forward.2} parent=1 // pred_check_branch
      %811 = sbr.rel (0) target = $region69
    $region68: #{forward.2} parent=1 // pred_region
      _
    $region69: #{forward.2} parent=1 // pred_fallthru
      _
    // Predicated region
    $region70: #{forward.2} parent=1 // pred_check
      _
    $region71: #{forward.2} parent=1 // pred_check_branch
      %813 = sbr.rel (0) target = $region73
    $region72: #{forward.2} parent=1 // pred_region
      _
    $region73: #{forward.2} parent=1 // pred_fallthru
      _
    // Predicated region
    $region74: #{forward.2} parent=1 // pred_check
      _
    $region75: #{forward.2} parent=1 // pred_check_branch
      %815 = sbr.rel (0) target = $region77
    $region76: #{forward.2} parent=1 // pred_region
      _
    $region77: #{forward.2} parent=1 // pred_fallthru
      _
    %816 = vsyncpa [#allocation5], 1
    %817 = vsyncpa [#allocation7], 1

</llo_original>
